<compile_context>
chip_gen: v7x
topology: tpu7x:2x2x1
jax: 0.10.0
libtpu: 0.0.40
codegen_flags: <defaults>
</compile_context>

<pallas_src>
import functools

import jax
import jax.numpy as jnp
from jax import lax
from jax.experimental import pallas as pl
from jax.experimental.pallas import tpu as pltpu


def _round_up(v, m):
    return (v + m - 1) // m * m


def _upper_bound_kernel(x_ref, labels_ref, c_ref, loss_ref, acc_ref, *,
                        num_classes, batch_size):
    i = pl.program_id(0)

    @pl.when(i == 0)
    def _init():
        loss_ref[0, 0] = jnp.float32(0.0)
        acc_ref[0, 0] = jnp.int32(0)

    x = x_ref[...]              # (TB, Dp) f32
    centers = c_ref[...]        # (Cp, Dp) f32
    labels = labels_ref[...]    # (TB, 1)  i32 (padded rows carry -1)

    TB = x.shape[0]
    Cp = centers.shape[0]

    # squared norms
    x_sq = jnp.sum(x * x, axis=1, keepdims=True)                 # (TB, 1)
    c_sq = jnp.sum(centers * centers, axis=1, keepdims=True)     # (Cp, 1)

    # cross term on the MXU, contracting the lane (feature) axis of both operands
    cross = lax.dot_general(
        x, centers,
        dimension_numbers=(((1,), (1,)), ((), ())),
        preferred_element_type=jnp.float32)                      # (TB, Cp)

    # distmat = ||x||^2 + ||c||^2 - 2 x c^T  (matches addmm_(1, -2, x, centers.t()))
    distmat = x_sq + c_sq.T - 2.0 * cross                        # (TB, Cp)

    classes = lax.broadcasted_iota(jnp.int32, (TB, Cp), 1)       # (TB, Cp)
    valid_class = classes < num_classes                          # mask lane padding
    maskf = (labels == classes).astype(jnp.float32)              # labels < C, so padding never matches

    # accuracy with first-index argmin semantics (like torch.min)
    big = jnp.float32(1e30)
    dist_min_src = jnp.where(valid_class, distmat, big)
    min_val = jnp.min(dist_min_src, axis=1, keepdims=True)       # (TB, 1)
    cand = jnp.where(dist_min_src == min_val, classes, jnp.int32(Cp))
    near_ind = jnp.min(cand, axis=1, keepdims=True)              # (TB, 1)
    correct = (near_ind == labels).astype(jnp.int32)             # padded rows (label=-1) never match
    acc_partial = jnp.sum(correct)

    # loss: k_sum = row_sum - i_sum (drops the second masked multiply+reduce)
    row_valid = (labels >= 0).astype(jnp.float32)                # (TB, 1) exclude padded rows
    dist_valid = jnp.where(valid_class, distmat, 0.0)
    row_sum = jnp.sum(dist_valid, axis=1, keepdims=True)         # (TB, 1)
    i_sum = jnp.sum(distmat * maskf, axis=1, keepdims=True)      # (TB, 1)
    k_sum = row_sum - i_sum

    inv_denom = jnp.float32(1.0 / (3.0 * (num_classes - 1)))
    loss_vec = (i_sum - k_sum * inv_denom) * row_valid           # (TB, 1)
    loss_partial = jnp.sum(loss_vec) / jnp.float32(batch_size)

    loss_ref[0, 0] += loss_partial
    acc_ref[0, 0] += acc_partial


def upper_bound_forward(x, centers, labels, *, tile_b=512):
    """x: (B, D) f32, centers: (C, D) f32, labels: (B,) int -> (loss scalar, acc int)."""
    B, D = x.shape
    C, _ = centers.shape

    # Lane-dense padding (multiples of 128 on the lane axis, 8 on the sublane axis).
    D_pad = _round_up(D, 128)
    C_pad = _round_up(C, 128)
    TB = min(_round_up(B, 8), _round_up(tile_b, 8))
    B_pad = _round_up(B, TB)
    grid_b = B_pad // TB

    x_p = jnp.zeros((B_pad, D_pad), jnp.float32).at[:B, :D].set(x.astype(jnp.float32))
    c_p = jnp.zeros((C_pad, D_pad), jnp.float32).at[:C, :D].set(centers.astype(jnp.float32))
    lab_p = jnp.full((B_pad, 1), -1, dtype=jnp.int32).at[:B, 0].set(labels.astype(jnp.int32))

    kernel = functools.partial(_upper_bound_kernel, num_classes=C, batch_size=B)

    # Rough VMEM budget: double-buffered x/labels blocks + centers + (TB, Cp) intermediates.
    est = 4 * (2 * 2 * (TB * D_pad + TB) + 2 * C_pad * D_pad
               + 8 * TB * C_pad + 4 * TB * D_pad)
    vmem_limit = int(min(max(est, 16 * 1024 * 1024), 48 * 1024 * 1024))

    loss, acc = pl.pallas_call(
        kernel,
        out_shape=(
            jax.ShapeDtypeStruct((1, 1), jnp.float32),
            jax.ShapeDtypeStruct((1, 1), jnp.int32),
        ),
        grid=(grid_b,),
        in_specs=[
            pl.BlockSpec((TB, D_pad), lambda i: (i, 0)),         # x tile
            pl.BlockSpec((TB, 1), lambda i: (i, 0)),             # labels tile
            pl.BlockSpec((C_pad, D_pad), lambda i: (0, 0)),      # centers (replicated)
        ],
        out_specs=(
            pl.BlockSpec(memory_space=pltpu.MemorySpace.SMEM),   # loss scalar accumulator
            pl.BlockSpec(memory_space=pltpu.MemorySpace.SMEM),   # acc scalar accumulator
        ),
        compiler_params=pltpu.CompilerParams(
            dimension_semantics=("arbitrary",),                  # output accumulates across the grid
            vmem_limit_bytes=vmem_limit,
        ),
    )(x_p, lab_p, c_p)

    return loss[0, 0], acc[0, 0]


def _reference(x, centers, labels):
    B, _ = x.shape
    C, _ = centers.shape
    distmat = (
        jnp.sum(x ** 2, axis=1, keepdims=True)
        + jnp.sum(centers ** 2, axis=1)[None, :]
        - 2.0 * x @ centers.T
    )
    classes = jnp.arange(C)
    mask = labels[:, None] == classes[None, :]
    near_ind = jnp.argmin(distmat, axis=1)
    acc = jnp.sum((near_ind == labels).astype(jnp.int32))
    i_sum = jnp.sum(distmat * mask, axis=1)
    k_sum = jnp.sum(distmat * (~mask), axis=1)
    loss = jnp.sum(i_sum - k_sum / (3 * (C - 1))) / B
    return loss, acc


if __name__ == "__main__":
    # small shapes consistent with the module defaults
    num_classes = 10
    feat_dim = 32
    batch = 8

    key = jax.random.PRNGKey(0)
    kx, kc, kl = jax.random.split(key, 3)
    x = jax.random.normal(kx, (batch, feat_dim), dtype=jnp.float32)
    centers = jax.random.normal(kc, (num_classes, feat_dim), dtype=jnp.float32)
    labels = jax.random.randint(kl, (batch,), 0, num_classes, dtype=jnp.int32)

    loss, acc = upper_bound_forward(x, centers, labels)
    jax.block_until_ready((loss, acc))

    ref_loss, ref_acc = _reference(x, centers, labels)
    assert jnp.allclose(loss, ref_loss, rtol=1e-5, atol=1e-5), (loss, ref_loss)
    assert int(acc) == int(ref_acc), (int(acc), int(ref_acc))

    # second case: multi-tile grid + padded rows/classes/features exercised
    k2x, k2c, k2l = jax.random.split(jax.random.PRNGKey(1), 3)
    B2, D2, C2 = 200, 48, 21
    x2 = jax.random.normal(k2x, (B2, D2), dtype=jnp.float32)
    c2 = jax.random.normal(k2c, (C2, D2), dtype=jnp.float32)
    l2 = jax.random.randint(k2l, (B2,), 0, C2, dtype=jnp.int32)
    loss2, acc2 = upper_bound_forward(x2, c2, l2, tile_b=64)
    jax.block_until_ready((loss2, acc2))
    ref_loss2, ref_acc2 = _reference(x2, c2, l2)
    assert jnp.allclose(loss2, ref_loss2, rtol=1e-4, atol=1e-4), (loss2, ref_loss2)
    assert int(acc2) == int(ref_acc2), (int(acc2), int(ref_acc2))

    print("KERNEL_OK")
</pallas_src>

<mosaic_0001>
module attributes {stable_mosaic.version = 11 : i64} {
  func.func @_upper_bound_kernel(%arg0: i32, %arg1: memref<8x128xf32, #tpu.memory_space<vmem>>, %arg2: memref<8x1xi32, #tpu.memory_space<vmem>>, %arg3: memref<128x128xf32, #tpu.memory_space<vmem>>, %arg4: memref<1x1xf32, #tpu.memory_space<smem>>, %arg5: memref<1x1xi32, #tpu.memory_space<smem>>) attributes {dimension_semantics = [#tpu.dimension_semantics<arbitrary>], iteration_bounds = array<i64: 1>, scalar_prefetch = 0 : i64, scratch_operands = 0 : i64, tpu.core_type = #tpu.core_type<tc>, window_params = [{transform_indices = @transform_0, window_bounds = array<i64: 8, 128>}, {transform_indices = @transform_1, window_bounds = array<i64: 8, 1>}, {pipeline_mode = #tpu.pipeline_mode<synchronous>, transform_indices = @transform_2, window_bounds = array<i64: 128, 128>}, {transform_indices = @transform_3, window_bounds = array<i64: 1, 1>}, {transform_indices = @transform_4, window_bounds = array<i64: 1, 1>}]} {
    %c0_i32 = arith.constant 0 : i32
    %0 = arith.cmpi eq, %arg0, %c0_i32 : i32
    %1 = arith.extui %0 : i1 to i32
    %c0_i32_0 = arith.constant 0 : i32
    %2 = arith.cmpi ne, %1, %c0_i32_0 : i32
    scf.if %2 {
      %cst_28 = arith.constant 0.000000e+00 : f32
      %c0_29 = arith.constant 0 : index
      %c0_30 = arith.constant 0 : index
      %70 = memref.load %arg4[%c0_29, %c0_30] : memref<1x1xf32, #tpu.memory_space<smem>>
      memref.store %cst_28, %arg4[%c0_29, %c0_30] : memref<1x1xf32, #tpu.memory_space<smem>>
      %c0_i32_31 = arith.constant 0 : i32
      %c0_32 = arith.constant 0 : index
      %c0_33 = arith.constant 0 : index
      %71 = memref.load %arg5[%c0_32, %c0_33] : memref<1x1xi32, #tpu.memory_space<smem>>
      memref.store %c0_i32_31, %arg5[%c0_32, %c0_33] : memref<1x1xi32, #tpu.memory_space<smem>>
    } else {
    }
    %c0 = arith.constant 0 : index
    %c0_1 = arith.constant 0 : index
    %3 = vector.load %arg1[%c0, %c0_1] : memref<8x128xf32, #tpu.memory_space<vmem>>, vector<8x128xf32>
    %c0_2 = arith.constant 0 : index
    %c0_3 = arith.constant 0 : index
    %4 = vector.load %arg3[%c0_2, %c0_3] : memref<128x128xf32, #tpu.memory_space<vmem>>, vector<128x128xf32>
    %c0_4 = arith.constant 0 : index
    %c0_5 = arith.constant 0 : index
    %5 = vector.load %arg2[%c0_4, %c0_5] : memref<8x1xi32, #tpu.memory_space<vmem>>, vector<8x1xi32>
    %6 = arith.mulf %3, %3 : vector<8x128xf32>
    %cst = arith.constant dense<0.000000e+00> : vector<8xf32>
    %7 = vector.multi_reduction <add>, %6, %cst [1] : vector<8x128xf32> to vector<8xf32>
    %8 = vector.shape_cast %7 : vector<8xf32> to vector<8x1xf32>
    %9 = arith.mulf %4, %4 : vector<128x128xf32>
    %cst_6 = arith.constant dense<0.000000e+00> : vector<128xf32>
    %10 = vector.multi_reduction <add>, %9, %cst_6 [1] : vector<128x128xf32> to vector<128xf32>
    %11 = vector.shape_cast %10 : vector<128xf32> to vector<128x1xf32>
    %cst_7 = arith.constant dense<0.000000e+00> : vector<8x128xf32>
    %12 = tpu.matmul %3, %4, %cst_7 {dimension_numbers = #tpu.dot_dimension_numbers<[1], [1], [0], [0], [0, 0, 1, 0], [], []>} : vector<8x128xf32>, vector<128x128xf32>, vector<8x128xf32> -> vector<8x128xf32>
    %13 = tpu.transpose %11, [1, 0] : vector<128x1xf32> -> vector<1x128xf32>
    %14 = vector.broadcast %8 : vector<8x1xf32> to vector<8x128xf32>
    %15 = vector.broadcast %13 : vector<1x128xf32> to vector<8x128xf32>
    %16 = arith.addf %14, %15 : vector<8x128xf32>
    %cst_8 = arith.constant 2.000000e+00 : f32
    %17 = vector.broadcast %cst_8 : f32 to vector<8x128xf32>
    %18 = arith.mulf %17, %12 : vector<8x128xf32>
    %19 = arith.subf %16, %18 : vector<8x128xf32>
    %20 = tpu.iota {dimensions = array<i32: 1>} : vector<8x128xi32>
    %c10_i32 = arith.constant 10 : i32
    %21 = vector.broadcast %c10_i32 : i32 to vector<8x128xi32>
    %22 = arith.cmpi slt, %20, %21 : vector<8x128xi32>
    %23 = vector.broadcast %5 : vector<8x1xi32> to vector<8x128xi32>
    %24 = arith.cmpi eq, %23, %20 : vector<8x128xi32>
    %25 = arith.extui %24 : vector<8x128xi1> to vector<8x128xi32>
    %26 = arith.sitofp %25 : vector<8x128xi32> to vector<8x128xf32>
    %cst_9 = arith.constant 1.000000e+30 : f32
    %27 = vector.broadcast %cst_9 : f32 to vector<8x128xf32>
    %28 = arith.select %22, %19, %27 : vector<8x128xi1>, vector<8x128xf32>
    %cst_10 = arith.constant dense<0x7F800000> : vector<8xf32>
    %29 = vector.multi_reduction <minimumf>, %28, %cst_10 [1] : vector<8x128xf32> to vector<8xf32>
    %30 = vector.shape_cast %29 : vector<8xf32> to vector<8x1xf32>
    %31 = vector.broadcast %30 : vector<8x1xf32> to vector<8x128xf32>
    %32 = arith.cmpf oeq, %28, %31 : vector<8x128xf32>
    %c128_i32 = arith.constant 128 : i32
    %33 = vector.broadcast %c128_i32 : i32 to vector<8x128xi32>
    %34 = arith.select %32, %20, %33 : vector<8x128xi1>, vector<8x128xi32>
    %cst_11 = arith.constant dense<2147483647> : vector<8xi32>
    %35 = vector.multi_reduction <minsi>, %34, %cst_11 [1] : vector<8x128xi32> to vector<8xi32>
    %36 = vector.shape_cast %35 : vector<8xi32> to vector<8x1xi32>
    %37 = arith.cmpi eq, %36, %5 : vector<8x1xi32>
    %38 = arith.extui %37 : vector<8x1xi1> to vector<8x1xi32>
    %39 = vector.shape_cast %38 : vector<8x1xi32> to vector<1x8x1xi32>
    %cst_12 = arith.constant dense<0> : vector<1xi32>
    %40 = vector.multi_reduction <add>, %39, %cst_12 [1, 2] : vector<1x8x1xi32> to vector<1xi32>
    %41 = vector.shape_cast %40 : vector<1xi32> to vector<1x1x1xi32>
    %42 = vector.extract %41[0, 0, 0] : i32 from vector<1x1x1xi32>
    %c0_i32_13 = arith.constant 0 : i32
    %43 = vector.broadcast %c0_i32_13 : i32 to vector<8x1xi32>
    %44 = arith.cmpi sge, %5, %43 : vector<8x1xi32>
    %45 = arith.extui %44 : vector<8x1xi1> to vector<8x1xi32>
    %46 = arith.sitofp %45 : vector<8x1xi32> to vector<8x1xf32>
    %cst_14 = arith.constant 0.000000e+00 : f32
    %47 = vector.broadcast %cst_14 : f32 to vector<8x128xf32>
    %48 = arith.select %22, %19, %47 : vector<8x128xi1>, vector<8x128xf32>
    %cst_15 = arith.constant dense<0.000000e+00> : vector<8xf32>
    %49 = vector.multi_reduction <add>, %48, %cst_15 [1] : vector<8x128xf32> to vector<8xf32>
    %50 = vector.shape_cast %49 : vector<8xf32> to vector<8x1xf32>
    %51 = arith.mulf %19, %26 : vector<8x128xf32>
    %cst_16 = arith.constant dense<0.000000e+00> : vector<8xf32>
    %52 = vector.multi_reduction <add>, %51, %cst_16 [1] : vector<8x128xf32> to vector<8xf32>
    %53 = vector.shape_cast %52 : vector<8xf32> to vector<8x1xf32>
    %54 = arith.subf %50, %53 : vector<8x1xf32>
    %cst_17 = arith.constant 0.0370370373 : f32
    %55 = vector.broadcast %cst_17 : f32 to vector<8x1xf32>
    %56 = arith.mulf %54, %55 : vector<8x1xf32>
    %57 = arith.subf %53, %56 : vector<8x1xf32>
    %58 = arith.mulf %57, %46 : vector<8x1xf32>
    %59 = vector.shape_cast %58 : vector<8x1xf32> to vector<1x8x1xf32>
    %cst_18 = arith.constant dense<0.000000e+00> : vector<1xf32>
    %60 = vector.multi_reduction <add>, %59, %cst_18 [1, 2] : vector<1x8x1xf32> to vector<1xf32>
    %61 = vector.shape_cast %60 : vector<1xf32> to vector<1x1x1xf32>
    %62 = vector.extract %61[0, 0, 0] : f32 from vector<1x1x1xf32>
    %cst_19 = arith.constant 8.000000e+00 : f32
    %63 = arith.divf %62, %cst_19 : f32
    %c0_20 = arith.constant 0 : index
    %c0_21 = arith.constant 0 : index
    %64 = memref.load %arg4[%c0_20, %c0_21] : memref<1x1xf32, #tpu.memory_space<smem>>
    %65 = arith.addf %64, %63 : f32
    %c0_22 = arith.constant 0 : index
    %c0_23 = arith.constant 0 : index
    %66 = memref.load %arg4[%c0_22, %c0_23] : memref<1x1xf32, #tpu.memory_space<smem>>
    memref.store %65, %arg4[%c0_22, %c0_23] : memref<1x1xf32, #tpu.memory_space<smem>>
    %c0_24 = arith.constant 0 : index
    %c0_25 = arith.constant 0 : index
    %67 = memref.load %arg5[%c0_24, %c0_25] : memref<1x1xi32, #tpu.memory_space<smem>>
    %68 = arith.addi %67, %42 : i32
    %c0_26 = arith.constant 0 : index
    %c0_27 = arith.constant 0 : index
    %69 = memref.load %arg5[%c0_26, %c0_27] : memref<1x1xi32, #tpu.memory_space<smem>>
    memref.store %68, %arg5[%c0_26, %c0_27] : memref<1x1xi32, #tpu.memory_space<smem>>
    return
  }
  func.func @transform_0(%arg0: i32) -> (i32, i32) {
    %c0_i32 = arith.constant 0 : i32
    %c0_i32_0 = arith.constant 0 : i32
    return %arg0, %c0_i32 : i32, i32
  }
  func.func @transform_1(%arg0: i32) -> (i32, i32) {
    %c0_i32 = arith.constant 0 : i32
    %c0_i32_0 = arith.constant 0 : i32
    return %arg0, %c0_i32 : i32, i32
  }
  func.func @transform_2(%arg0: i32) -> (i32, i32) {
    %c0_i32 = arith.constant 0 : i32
    %c0_i32_0 = arith.constant 0 : i32
    %c0_i32_1 = arith.constant 0 : i32
    return %c0_i32, %c0_i32_0 : i32, i32
  }
  func.func @transform_3(%arg0: i32) -> (i32, i32) {
    %c0_i32 = arith.constant 0 : i32
    %c0_i32_0 = arith.constant 0 : i32
    %c0_i32_1 = arith.constant 0 : i32
    return %c0_i32, %c0_i32_0 : i32, i32
  }
  func.func @transform_4(%arg0: i32) -> (i32, i32) {
    %c0_i32 = arith.constant 0 : i32
    %c0_i32_0 = arith.constant 0 : i32
    %c0_i32_1 = arith.constant 0 : i32
    return %c0_i32, %c0_i32_0 : i32, i32
  }
}

</mosaic_0001>

<llo_original>
// kernel: tpu_custom_call.1
$region0: #{tpu_custom_call.1}
  #allocation0 [shape = 'u32[]', space=smem, size = 0x4, offset = 0x4, fixed_abs, tag = 'smem constant byte address 0x4 - core index']
  #allocation1 [shape = 'u32[144,128]{1,0:T(1,128)}', space=vmem, size = 0x12000, scoped, tag = 'internal scratch']
  %s0 = inlined_call_operand.vmem [shape: f32[8,128], index: 0, kind: input, shape index: {}]
  %s1 = inlined_call_operand.vmem [shape: s32[8,1], index: 1, kind: input, shape index: {}]
  %s2 = inlined_call_operand.hbm [shape: f32[128,128], index: 2, kind: input, shape index: {}]
  %s3 = inlined_call_operand.hbm [shape: f32[1,1], index: 3, kind: output, shape index: {0}]
  %s4 = inlined_call_operand.hbm [shape: s32[1,1], index: 4, kind: output, shape index: {1}]
  %5 = xla_tuple %s3, %s4
  %s6 = sld [smem:[#allocation0]]
  $region38: #{tpu_custom_call.1} parent=0
    _
  %s8 = ssub.s32 1, %s6
  %s9 = scalar_select 0, %s8, %s6
  $region1: #{tpu_custom_call.1} parent=0
    #allocation2 [shape = 'u8[65536]{0}', space=vmem, size = 0x10000, scoped, tag = 'input window, operand 2, single buffered']
    #allocation3 [shape = 's32[1]{0}', space=sflag, size = 0x4, scoped, tag = 'scoped memory for tpu_custom_call.1']
    #allocation4 [shape = 's32[1]{0}', space=sflag, size = 0x4, scoped, tag = 'scoped memory for tpu_custom_call.1']
    #allocation5 [shape = 'u8[512]{0}', space=smem, size = 0x200, scoped, tag = 'output window, operand 0, single buffered']
    #allocation6 [shape = 'u8[512]{0}', space=smem, size = 0x200, scoped, tag = 'output window, operand 1, single buffered']
    #allocation7 [shape = 's32[1]{0}', space=sflag, size = 0x4, scoped, tag = 'scoped memory for tpu_custom_call.1']
    %10 = vsyncpa [#allocation3], 0
    %11 = vsyncpa [#allocation4], 0
    %12 = vsyncpa [#allocation7], 0
    // Predicated region
    $region2: #{tpu_custom_call.1} parent=1 // pred_check
      _
    $region3: #{tpu_custom_call.1} parent=1 // pred_check_branch
      %14 = sbr.rel (0) target = $region5
    $region4: #{tpu_custom_call.1} parent=1 // pred_region
      _
    $region5: #{tpu_custom_call.1} parent=1 // pred_fallthru
      _
    // Predicated region
    $region6: #{tpu_custom_call.1} parent=1 // pred_check
      _
    $region7: #{tpu_custom_call.1} parent=1 // pred_check_branch
      %16 = sbr.rel (0) target = $region9
    $region8: #{tpu_custom_call.1} parent=1 // pred_region
      _
    $region9: #{tpu_custom_call.1} parent=1 // pred_fallthru
      _
    // Predicated region
    $region10: #{tpu_custom_call.1} parent=1 // pred_check
      _
    $region11: #{tpu_custom_call.1} parent=1 // pred_check_branch
      %18 = sbr.rel (0) target = $region13
    $region12: #{tpu_custom_call.1} parent=1 // pred_region
      %s20 = ssub.s32 2048, 2048
      %21 = vsyncadd [#allocation3], %s20
      %s22 = sshll.u32 [#allocation2], 4
      %s23 = int_to_ptr.vmem [resolvable:$true] %s22
      %28 = dma.hbm_to_vmem [thread:$0]  %s2, 2048, %s23, [#allocation3], 128, 128, 8
    $region13: #{tpu_custom_call.1} parent=1 // pred_fallthru
      _
    // Predicated region
    $region14: #{tpu_custom_call.1} parent=1 // pred_check
      _
    $region15: #{tpu_custom_call.1} parent=1 // pred_check_branch
      %30 = sbr.rel (0) target = $region17
    $region16: #{tpu_custom_call.1} parent=1 // pred_region
      %31 = dma.done [#allocation3], 2048
    $region17: #{tpu_custom_call.1} parent=1 // pred_fallthru
      _
    %p32 = scmp.eq.s32.totalorder 0, 0
    // Predicated region
    $region18: #{tpu_custom_call.1} parent=1 // pred_check
      %p33 = pneg %p32
    $region19: #{tpu_custom_call.1} parent=1 // pred_check_branch
      %35 = sbr.rel (%p33) target = $region21
    $region20: #{tpu_custom_call.1} parent=1 // pred_region
      %s36 = scalar_lea.smem [#allocation5], 0
      %37 = sst [smem:[%s36]] 0.0
      %s38 = scalar_lea.smem [#allocation6], 0
      %39 = sst [smem:[%s38]] 0
    $region21: #{tpu_custom_call.1} parent=1 // pred_fallthru
      _
    %v40 = vld [vmem:[%s0] sm:$0xff]
    %v41 = vld [vmem:[#allocation2] sm:$0xff]
    %v42 = vld [vmem:[#allocation2 + $0x8] sm:$0xff]
    %v43 = vld [vmem:[#allocation2 + $0x10] sm:$0xff]
    %v44 = vld [vmem:[#allocation2 + $0x18] sm:$0xff]
    %v45 = vld [vmem:[#allocation2 + $0x20] sm:$0xff]
    %v46 = vld [vmem:[#allocation2 + $0x28] sm:$0xff]
    %v47 = vld [vmem:[#allocation2 + $0x30] sm:$0xff]
    %v48 = vld [vmem:[#allocation2 + $0x38] sm:$0xff]
    %v49 = vld [vmem:[#allocation2 + $0x40] sm:$0xff]
    %v50 = vld [vmem:[#allocation2 + $0x48] sm:$0xff]
    %v51 = vld [vmem:[#allocation2 + $0x50] sm:$0xff]
    %v52 = vld [vmem:[#allocation2 + $0x58] sm:$0xff]
    %v53 = vld [vmem:[#allocation2 + $0x60] sm:$0xff]
    %v54 = vld [vmem:[#allocation2 + $0x68] sm:$0xff]
    %v55 = vld [vmem:[#allocation2 + $0x70] sm:$0xff]
    %v56 = vld [vmem:[#allocation2 + $0x78] sm:$0xff]
    %v57 = vld [vmem:[%s1] sm:$0xff]
    %v58 = vmul.f32 %v40, %v40
    %59 = vadd.xlane.f32.xlu0 %v58
    %v60 = vpop.xlane.xlu0 %59
    %v61 = vmul.f32 %v41, %v41
    %v62 = vmul.f32 %v42, %v42
    %v63 = vmul.f32 %v43, %v43
    %v64 = vmul.f32 %v44, %v44
    %v65 = vmul.f32 %v45, %v45
    %v66 = vmul.f32 %v46, %v46
    %v67 = vmul.f32 %v47, %v47
    %v68 = vmul.f32 %v48, %v48
    %v69 = vmul.f32 %v49, %v49
    %v70 = vmul.f32 %v50, %v50
    %v71 = vmul.f32 %v51, %v51
    %v72 = vmul.f32 %v52, %v52
    %v73 = vmul.f32 %v53, %v53
    %v74 = vmul.f32 %v54, %v54
    %v75 = vmul.f32 %v55, %v55
    %v76 = vmul.f32 %v56, %v56
    %77 = vadd.xlane.f32.xlu0 %v61
    %v78 = vpop.xlane.xlu0 %77
    %79 = vadd.xlane.f32.xlu0 %v62
    %v80 = vpop.xlane.xlu0 %79
    %81 = vadd.xlane.f32.xlu0 %v63
    %v82 = vpop.xlane.xlu0 %81
    %83 = vadd.xlane.f32.xlu0 %v64
    %v84 = vpop.xlane.xlu0 %83
    %85 = vadd.xlane.f32.xlu0 %v65
    %v86 = vpop.xlane.xlu0 %85
    %87 = vadd.xlane.f32.xlu0 %v66
    %v88 = vpop.xlane.xlu0 %87
    %89 = vadd.xlane.f32.xlu0 %v67
    %v90 = vpop.xlane.xlu0 %89
    %91 = vadd.xlane.f32.xlu0 %v68
    %v92 = vpop.xlane.xlu0 %91
    %93 = vadd.xlane.f32.xlu0 %v69
    %v94 = vpop.xlane.xlu0 %93
    %95 = vadd.xlane.f32.xlu0 %v70
    %v96 = vpop.xlane.xlu0 %95
    %97 = vadd.xlane.f32.xlu0 %v71
    %v98 = vpop.xlane.xlu0 %97
    %99 = vadd.xlane.f32.xlu0 %v72
    %v100 = vpop.xlane.xlu0 %99
    %101 = vadd.xlane.f32.xlu0 %v73
    %v102 = vpop.xlane.xlu0 %101
    %103 = vadd.xlane.f32.xlu0 %v74
    %v104 = vpop.xlane.xlu0 %103
    %105 = vadd.xlane.f32.xlu0 %v75
    %v106 = vpop.xlane.xlu0 %105
    %107 = vadd.xlane.f32.xlu0 %v76
    %v108 = vpop.xlane.xlu0 %107
    %109 = vmatprep.subr.mxu0 0.0
    %110 = vmatpush1.xpose.msra.mxu0 %v41
    %111 = vmatprep.subr.mxu0 0.0
    %112 = vmatpush1.xpose.msra.mxu0 %v42
    %113 = vmatprep.subr.mxu0 0.0
    %114 = vmatpush1.xpose.msra.mxu0 %v43
    %115 = vmatprep.subr.mxu0 0.0
    %116 = vmatpush1.xpose.msra.mxu0 %v44
    %117 = vmatprep.subr.mxu0 0.0
    %118 = vmatpush1.xpose.msra.mxu0 %v45
    %119 = vmatprep.subr.mxu0 0.0
    %120 = vmatpush1.xpose.msra.mxu0 %v46
    %121 = vmatprep.subr.mxu0 0.0
    %122 = vmatpush1.xpose.msra.mxu0 %v47
    %123 = vmatprep.subr.mxu0 0.0
    %124 = vmatpush1.xpose.msra.mxu0 %v48
    %125 = vmatprep.subr.mxu0 0.0
    %126 = vmatpush1.xpose.msra.mxu0 %v49
    %127 = vmatprep.subr.mxu0 0.0
    %128 = vmatpush1.xpose.msra.mxu0 %v50
    %129 = vmatprep.subr.mxu0 0.0
    %130 = vmatpush1.xpose.msra.mxu0 %v51
    %131 = vmatprep.subr.mxu0 0.0
    %132 = vmatpush1.xpose.msra.mxu0 %v52
    %133 = vmatprep.subr.mxu0 0.0
    %134 = vmatpush1.xpose.msra.mxu0 %v53
    %135 = vmatprep.subr.mxu0 0.0
    %136 = vmatpush1.xpose.msra.mxu0 %v54
    %137 = vmatprep.subr.mxu0 0.0
    %138 = vmatpush1.xpose.msra.mxu0 %v55
    %139 = vmatprep.subr.mxu0 0.0
    %140 = vmatpush1.xpose.msra.mxu0 %v56
    %141 = vmatprep.subr.mxu0 0.0
    %142 = vmatpush1.xpose.msra.mxu0 0.0
    %143 = vmatprep.subr.mxu0 0.0
    %144 = vmatpush1.xpose.msra.mxu0 0.0
    %145 = vmatprep.subr.mxu0 0.0
    %146 = vmatpush1.xpose.msra.mxu0 0.0
    %147 = vmatprep.subr.mxu0 0.0
    %148 = vmatpush1.xpose.msra.mxu0 0.0
    %149 = vmatprep.subr.mxu0 0.0
    %150 = vmatpush1.xpose.msra.mxu0 0.0
    %151 = vmatprep.subr.mxu0 0.0
    %152 = vmatpush1.xpose.msra.mxu0 0.0
    %153 = vmatprep.subr.mxu0 0.0
    %154 = vmatpush1.xpose.msra.mxu0 0.0
    %155 = vmatprep.subr.mxu0 0.0
    %156 = vmatpush1.xpose.msra.mxu0 0.0
    %157 = vmatprep.subr.mxu0 0.0
    %158 = vmatpush1.xpose.msra.mxu0 0.0
    %159 = vmatprep.subr.mxu0 0.0
    %160 = vmatpush1.xpose.msra.mxu0 0.0
    %161 = vmatprep.subr.mxu0 0.0
    %162 = vmatpush1.xpose.msra.mxu0 0.0
    %163 = vmatprep.subr.mxu0 0.0
    %164 = vmatpush1.xpose.msra.mxu0 0.0
    %165 = vmatprep.subr.mxu0 0.0
    %166 = vmatpush1.xpose.msra.mxu0 0.0
    %167 = vmatprep.subr.mxu0 0.0
    %168 = vmatpush1.xpose.msra.mxu0 0.0
    %169 = vmatprep.subr.mxu0 0.0
    %170 = vmatpush1.xpose.msra.mxu0 0.0
    %171 = vmatprep.subr.mxu0 0.0
    %172 = vmatpush1.xpose.msra.mxu0 0.0
    %173 = vmatprep.mubr.f32.mxu0 0.0
    %174 = vmatmul.mubr.f32.gmra.mrb[0].mxu0 %v40
    %v175 = vpop.f32.mrb[0].mxu0
    %v176 = vadd.f32 0.0, %v175
    %v177 = vpop.f32.mrb[0].mxu0
    %178 = vdwg.mxu0
    %179 = vxpose.xlu0.b32.start [1/16] %v78, 128
    %180 = vxpose.xlu0.b32.cont [2/16] %v80, 128
    %181 = vxpose.xlu0.b32.cont [3/16] %v82, 128
    %182 = vxpose.xlu0.b32.cont [4/16] %v84, 128
    %183 = vxpose.xlu0.b32.cont [5/16] %v86, 128
    %184 = vxpose.xlu0.b32.cont [6/16] %v88, 128
    %185 = vxpose.xlu0.b32.cont [7/16] %v90, 128
    %186 = vxpose.xlu0.b32.cont [8/16] %v92, 128
    %187 = vxpose.xlu0.b32.cont [9/16] %v94, 128
    %188 = vxpose.xlu0.b32.cont [10/16] %v96, 128
    %189 = vxpose.xlu0.b32.cont [11/16] %v98, 128
    %190 = vxpose.xlu0.b32.cont [12/16] %v100, 128
    %191 = vxpose.xlu0.b32.cont [13/16] %v102, 128
    %192 = vxpose.xlu0.b32.cont [14/16] %v104, 128
    %193 = vxpose.xlu0.b32.cont [15/16] %v106, 128
    %194 = vxpose.xlu0.b32.end [16/16] %v108, 128
    %v195 = vpop.trf.xlu0
    %v196 = vpop.trf.xlu0
    %v197 = vpop.trf.xlu0
    %v198 = vpop.trf.xlu0
    %v199 = vpop.trf.xlu0
    %v200 = vpop.trf.xlu0
    %v201 = vpop.trf.xlu0
    %v202 = vpop.trf.xlu0
    %v203 = vpop.trf.xlu0
    %v204 = vpop.trf.xlu0
    %v205 = vpop.trf.xlu0
    %v206 = vpop.trf.xlu0
    %v207 = vpop.trf.xlu0
    %v208 = vpop.trf.xlu0
    %v209 = vpop.trf.xlu0
    %v210 = vpop.trf.xlu0
    %v211 = vlaneseq
    %v212 = vshrl.u32 %v211, 7
    %v213 = vsub.s32 0, %v212
    %v214 = vrot.slane %v195, %v213
    %v215 = vadd.f32 %v60, %v214
    %v216 = vmul.f32 %v176, 2.0
    %v217 = vsub.f32 %v215, %v216
    %v218 = vlaneseq
    %v219 = vand.u32 %v218, 127
    %vm220 = vcmp.lt.s32.totalorder %v219, 10
    %221 = vset.pattern.permute.xlu0 0
    %222 = vperm.xlu0 %221, %v57
    %v223 = vpop.permute.xlu0 %222
    %vm224 = vcmp.eq.s32.totalorder %v223, %v219
    %v225 = vsel %vm224, 1, 0
    %v226 = vcvt.s32.f32 %v225
    %v227 = vsel %vm220, %v217, 1e+30
    %228 = vmin.xlane.f32.xlu0 %v227
    %v229 = vpop.xlane.xlu0 %228
    %vm230 = vcmp.eq.f32.partialorder %v227, %v229
    %v231 = vsel %vm230, %v219, 128
    %v232 = vand.u32 %v231, 65535
    %v233 = vshra.s32 %v231, 16
    %v234 = vcvt.s32.f32 %v232
    %v235 = vcvt.s32.f32 %v233
    %236 = vmin.xlane.f32.xlu0 %v235
    %v237 = vpop.xlane.xlu0 %236
    %vm238 = vcmp.eq.f32.partialorder %v235, %v237
    %v239 = vsel %vm238, %v234, inf
    %240 = vmin.xlane.f32.xlu0 %v239
    %v241 = vpop.xlane.xlu0 %240
    %v242 = vcvt.f32.s32 %v241
    %v243 = vcvt.f32.s32 %v237
    %v244 = vshll.u32 %v243, 16
    %v245 = vadd.s32 %v244, %v242
    %vm246 = vcmp.eq.s32.totalorder %v245, %v57
    %v247 = vsel %vm246, 1, 0
    %vm248 = vcmask 7168
    %v249 = vsel %vm248, %v247, 0
    %v250 = vand.u32 %v249, 65535
    %v251 = vshrl.u32 %v249, 16
    %v252 = vcvt.s32.f32 %v250
    %v253 = vcvt.s32.f32 %v251
    %254 = vadd.xlane.f32.xlu0 %v252
    %v255 = vpop.xlane.xlu0 %254
    %256 = vadd.xlane.f32.xlu0 %v253
    %v257 = vpop.xlane.xlu0 %256
    %v258 = vcvt.f32.s32 %v255
    %v259 = vcvt.f32.s32 %v257
    %v260 = vshll.u32 %v259, 16
    %v261 = vadd.s32 %v260, %v258
    %v262 = vrot.slane %v261, 4
    %v263 = vadd.s32 %v261, %v262
    %v264 = vrot.slane %v263, 2
    %v265 = vadd.s32 %v263, %v264
    %v266 = vrot.slane %v265, 1
    %v267 = vadd.s32 %v265, %v266
    %s268 = vtos %v267
    %vm269 = vcmp.ge.s32.totalorder %v57, 0
    %v270 = vsel %vm269, 1, 0
    %v271 = vcvt.s32.f32 %v270
    %v272 = vsel %vm220, %v217, 0.0
    %273 = vadd.xlane.f32.xlu0 %v272
    %v274 = vpop.xlane.xlu0 %273
    %v275 = vmul.f32 %v217, %v226
    %276 = vadd.xlane.f32.xlu0 %v275
    %v277 = vpop.xlane.xlu0 %276
    %v278 = vsub.f32 %v274, %v277
    %v279 = vmul.f32 %v278, 0.037037037
    %v280 = vsub.f32 %v277, %v279
    %v281 = vmul.f32 %v280, %v271
    %v282 = vsel %vm248, %v281, 0.0
    %283 = vadd.xlane.f32.xlu0 %v282
    %v284 = vpop.xlane.xlu0 %283
    %v285 = vrot.slane %v284, 4
    %v286 = vadd.f32 %v284, %v285
    %v287 = vrot.slane %v286, 2
    %v288 = vadd.f32 %v286, %v287
    %v289 = vrot.slane %v288, 1
    %v290 = vadd.f32 %v288, %v289
    %s291 = vtos %v290
    %v292 = vrcp.pop 8.0
    %s293 = vtos %v292
    %s294 = smul.f32 %s291, %s293
    %s295 = sld [smem:[#allocation5]]
    %s296 = sadd.f32 %s295, %s294
    %s297 = scalar_lea.smem [#allocation5], 0
    %298 = sst [smem:[%s297]] %s296
    %s299 = sld [smem:[#allocation6]]
    %s300 = sadd.s32 %s299, %s268
    %s301 = scalar_lea.smem [#allocation6], 0
    %302 = sst [smem:[%s301]] %s300
    // Predicated region
    $region22: #{tpu_custom_call.1} parent=1 // pred_check
      _
    $region23: #{tpu_custom_call.1} parent=1 // pred_check_branch
      %304 = sbr.rel (0) target = $region25
    $region24: #{tpu_custom_call.1} parent=1 // pred_region
      %s306 = ssub.s32 16, 16
      %307 = vsyncadd [#allocation4], %s306
      %310 = dma.smem_to_hbm [#allocation5], 16, %s3, [#allocation4]
    $region25: #{tpu_custom_call.1} parent=1 // pred_fallthru
      _
    // Predicated region
    $region26: #{tpu_custom_call.1} parent=1 // pred_check
      _
    $region27: #{tpu_custom_call.1} parent=1 // pred_check_branch
      %312 = sbr.rel (0) target = $region29
    $region28: #{tpu_custom_call.1} parent=1 // pred_region
      %s314 = ssub.s32 16, 16
      %315 = vsyncadd [#allocation7], %s314
      %318 = dma.smem_to_hbm [#allocation6], 16, %s4, [#allocation7]
    $region29: #{tpu_custom_call.1} parent=1 // pred_fallthru
      _
    // Predicated region
    $region30: #{tpu_custom_call.1} parent=1 // pred_check
      _
    $region31: #{tpu_custom_call.1} parent=1 // pred_check_branch
      %320 = sbr.rel (0) target = $region33
    $region32: #{tpu_custom_call.1} parent=1 // pred_region
      %321 = dma.done [#allocation4], 16
    $region33: #{tpu_custom_call.1} parent=1 // pred_fallthru
      _
    // Predicated region
    $region34: #{tpu_custom_call.1} parent=1 // pred_check
      _
    $region35: #{tpu_custom_call.1} parent=1 // pred_check_branch
      %323 = sbr.rel (0) target = $region37
    $region36: #{tpu_custom_call.1} parent=1 // pred_region
      %324 = dma.done [#allocation7], 16
    $region37: #{tpu_custom_call.1} parent=1 // pred_fallthru
      _
    %325 = sfence
    %326 = vsyncpa [#allocation3], 1
    %327 = vsyncpa [#allocation4], 1
    %328 = vsyncpa [#allocation7], 1

</llo_original>
